<compile_context>
chip_gen: v5e
topology: v5e:2x2
jax: 0.10.0
libtpu: 0.0.40
codegen_flags: <defaults>
</compile_context>

<pallas_src>
import functools

import jax
import jax.numpy as jnp
from jax.experimental import pallas as pl
from jax.experimental.pallas import tpu as pltpu


def _round_up(x: int, m: int) -> int:
    return ((x + m - 1) // m) * m


def _dc_bce_kernel(x_ref, t_ref, stats_ref, *, tile_s, valid_s, mask_cols):
    """One (TILE_R, TILE_S) tile: fused sigmoid/BCE + per-row reductions.

    stats_ref is a lane-dense (TILE_R, 128) accumulator resident in VMEM across
    the spatial ('arbitrary') grid axis; lanes 0..3 accumulate
    [intersect, sum_pred, sum_gt, bce_sum] per row.
    """
    j = pl.program_id(1)

    @pl.when(j == 0)
    def _():
        stats_ref[...] = jnp.zeros_like(stats_ref)

    x = x_ref[...].astype(jnp.float32)
    t = t_ref[...].astype(jnp.float32)

    # One exp per element, shared between sigmoid and the stable BCE-with-logits:
    #   e = exp(-|x|); sigmoid(x) = 1/(1+e) if x>=0 else e/(1+e)
    #   bce(x, t) = max(x, 0) - x*t + log1p(e)   (== BCEWithLogitsLoss elementwise)
    e = jnp.exp(-jnp.abs(x))
    inv = pl.reciprocal(1.0 + e)      # exact reciprocal (keeps ~1e-6 agreement)
    p = jnp.where(x >= 0, inv, e * inv)
    bce = jnp.maximum(x, 0.0) - x * t + jnp.log1p(e)

    pt = p * t
    if mask_cols:
        # Zero out contributions from the padded tail columns of the last
        # spatial block.  (Padded *rows* land in stats rows >= R and are simply
        # discarded by the wrapper, so they need no masking.)
        col = j * tile_s + jax.lax.broadcasted_iota(jnp.int32, x.shape, 1)
        valid = col < valid_s
        pt = jnp.where(valid, pt, 0.0)
        p = jnp.where(valid, p, 0.0)
        t = jnp.where(valid, t, 0.0)
        bce = jnp.where(valid, bce, 0.0)

    inter = jnp.sum(pt, axis=-1, keepdims=True)   # (TILE_R, 1)
    spred = jnp.sum(p, axis=-1, keepdims=True)
    sgt = jnp.sum(t, axis=-1, keepdims=True)
    bces = jnp.sum(bce, axis=-1, keepdims=True)

    # Pack the four per-row stats into lanes 0..3 of the 128-wide accumulator
    # (keeps every store lane-dense / unmasked, one output DMA per row block).
    lane = jax.lax.broadcasted_iota(jnp.int32, stats_ref.shape, 1)
    upd = jnp.where(lane == 0, inter,
          jnp.where(lane == 1, spred,
          jnp.where(lane == 2, sgt,
          jnp.where(lane == 3, bces, 0.0))))
    stats_ref[...] += upd


# ~4 MiB per f32 input block -> 2 inputs x 2 pipeline buffers ~= 16 MiB VMEM.
_DEFAULT_BLOCK_ELEMS = 1 << 20


@functools.partial(
    jax.jit,
    static_argnames=("weight_ce", "weight_dice", "smooth",
                     "max_tile_r", "max_block_elems"),
)
def dc_and_bce_loss(net_output, target, weight_ce=1.0, weight_dice=1.0,
                    smooth=1.0, max_tile_r=128,
                    max_block_elems=_DEFAULT_BLOCK_ELEMS):
    # TODO(synk): use_ignore_label=True masked variant not implemented (module default is False).
    B, C, H, W = net_output.shape
    R = B * C
    S = H * W

    # Flatten to (rows = B*C, spatial = H*W).  These reshapes are free under
    # jit (bitcasts); inputs keep their native dtypes and are cast in-kernel.
    x = net_output.reshape(R, S)
    t = target.reshape(R, S)

    # Tile selection: rows in multiples of 8 (sublanes), spatial in multiples
    # of 128 (lanes), targeting a few-MiB input block so the pipeline is
    # HBM-bandwidth-bound rather than per-step-overhead-bound.
    tile_r = min(max_tile_r, _round_up(R, 8))
    tile_s = min(_round_up(S, 128),
                 max(128, (max_block_elems // tile_r) // 128 * 128))
    n_r = pl.cdiv(R, tile_r)
    n_s = pl.cdiv(S, tile_s)

    kernel = functools.partial(
        _dc_bce_kernel, tile_s=tile_s, valid_s=S,
        mask_cols=(S % tile_s != 0))

    stats = pl.pallas_call(
        kernel,
        grid=(n_r, n_s),
        in_specs=[
            pl.BlockSpec((tile_r, tile_s), lambda i, j: (i, j)),
            pl.BlockSpec((tile_r, tile_s), lambda i, j: (i, j)),
        ],
        out_specs=pl.BlockSpec((tile_r, 128), lambda i, j: (i, 0)),
        out_shape=jax.ShapeDtypeStruct((n_r * tile_r, 128), jnp.float32),
        compiler_params=pltpu.CompilerParams(
            dimension_semantics=("parallel", "arbitrary"),
            vmem_limit_bytes=48 * 1024 * 1024,
        ),
    )(x, t)

    stats = stats[:R]                     # drop padded tail rows
    intersect = stats[:, 0]
    sum_pred = stats[:, 1]
    sum_gt = stats[:, 2]
    bce_total = jnp.sum(stats[:, 3])

    # MemoryEfficientSoftDiceLoss (batch_dice=False, do_bg=True, smooth)
    dc = (2.0 * intersect + smooth) / jnp.clip(sum_gt + sum_pred + smooth, 1e-8)
    dc_loss = -jnp.mean(dc)
    # BCEWithLogitsLoss, reduction='mean'
    ce_loss = bce_total / (R * S)

    return weight_ce * ce_loss + weight_dice * dc_loss


def _reference_loss(net_output, target, weight_ce=1.0, weight_dice=1.0, smooth=1.0):
    """Pure-JAX reference mirroring the PyTorch module."""
    x = net_output.astype(jnp.float32)
    y = target.astype(jnp.float32)
    bce = jnp.maximum(x, 0.0) - x * y + jnp.log1p(jnp.exp(-jnp.abs(x)))
    ce_loss = jnp.mean(bce)
    p = jax.nn.sigmoid(x)
    axes = (2, 3)
    intersect = jnp.sum(p * y, axis=axes)
    sum_pred = jnp.sum(p, axis=axes)
    sum_gt = jnp.sum(y, axis=axes)
    dc = (2.0 * intersect + smooth) / jnp.clip(sum_gt + sum_pred + smooth, 1e-8)
    dc_loss = -jnp.mean(dc)
    return weight_ce * ce_loss + weight_dice * dc_loss


if __name__ == "__main__":
    key = jax.random.PRNGKey(0)

    def _check(shape, k, **kwargs):
        k1, k2 = jax.random.split(k)
        logits = jax.random.normal(k1, shape, dtype=jnp.float32)
        tgt = jax.random.bernoulli(k2, 0.3, shape).astype(jnp.float32)
        got = jax.block_until_ready(dc_and_bce_loss(logits, tgt, **kwargs))
        ref = _reference_loss(logits, tgt)
        assert jnp.allclose(got, ref, rtol=1e-4, atol=1e-5), (shape, got, ref)

    k1, k2, k3 = jax.random.split(key, 3)
    # Main case: shapes divide the tiles exactly (single grid step).
    _check((2, 4, 16, 16), k1)
    # Ragged rows / columns: exercises in-kernel tail masking (no wrapper pad).
    _check((2, 3, 10, 30), k2)
    # Small tile caps -> (2, 2) grid: exercises spatial accumulation + parallel row axis.
    _check((3, 5, 12, 20), k3, max_tile_r=8, max_block_elems=8 * 128)

    print("KERNEL_OK")
</pallas_src>

<mosaic_0001>
module attributes {stable_mosaic.version = 11 : i64} {
  func.func @_dc_bce_kernel(%arg0: i32, %arg1: i32, %arg2: memref<8x256xf32, #tpu.memory_space<vmem>>, %arg3: memref<8x256xf32, #tpu.memory_space<vmem>>, %arg4: memref<8x128xf32, #tpu.memory_space<vmem>>) attributes {dimension_semantics = [#tpu.dimension_semantics<parallel>, #tpu.dimension_semantics<arbitrary>], iteration_bounds = array<i64: 1, 1>, scalar_prefetch = 0 : i64, scratch_operands = 0 : i64, tpu.core_type = #tpu.core_type<tc>, window_params = [{transform_indices = @transform_0, window_bounds = array<i64: 8, 256>}, {transform_indices = @transform_1, window_bounds = array<i64: 8, 256>}, {transform_indices = @transform_2, window_bounds = array<i64: 8, 128>}]} {
    %c0_i32 = arith.constant 0 : i32
    %0 = arith.cmpi eq, %arg1, %c0_i32 : i32
    %1 = arith.extui %0 : i1 to i32
    %c0_i32_0 = arith.constant 0 : i32
    %2 = arith.cmpi ne, %1, %c0_i32_0 : i32
    scf.if %2 {
      %cst_17 = arith.constant 0.000000e+00 : f32
      %56 = vector.broadcast %cst_17 : f32 to vector<8x128xf32>
      %c0_18 = arith.constant 0 : index
      %c0_19 = arith.constant 0 : index
      %57 = vector.load %arg4[%c0_18, %c0_19] : memref<8x128xf32, #tpu.memory_space<vmem>>, vector<8x128xf32>
      tpu.vector_store %arg4[%c0_18, %c0_19], %56 {strides = array<i32>} : memref<8x128xf32, #tpu.memory_space<vmem>>, vector<8x128xf32>,
    } else {
    }
    %c0 = arith.constant 0 : index
    %c0_1 = arith.constant 0 : index
    %3 = vector.load %arg2[%c0, %c0_1] : memref<8x256xf32, #tpu.memory_space<vmem>>, vector<8x256xf32>
    %c0_2 = arith.constant 0 : index
    %c0_3 = arith.constant 0 : index
    %4 = vector.load %arg3[%c0_2, %c0_3] : memref<8x256xf32, #tpu.memory_space<vmem>>, vector<8x256xf32>
    %5 = math.absf %3 : vector<8x256xf32>
    %cst = arith.constant 0.000000e+00 : f32
    %6 = vector.broadcast %cst : f32 to vector<8x256xf32>
    %7 = arith.subf %6, %5 : vector<8x256xf32>
    %8 = math.exp %7 : vector<8x256xf32>
    %cst_4 = arith.constant 1.000000e+00 : f32
    %9 = vector.broadcast %cst_4 : f32 to vector<8x256xf32>
    %10 = arith.addf %9, %8 : vector<8x256xf32>
    %11 = tpu.reciprocal %10 : vector<8x256xf32> -> vector<8x256xf32>
    %cst_5 = arith.constant 0.000000e+00 : f32
    %12 = vector.broadcast %cst_5 : f32 to vector<8x256xf32>
    %13 = arith.cmpf oge, %3, %12 : vector<8x256xf32>
    %14 = arith.mulf %8, %11 : vector<8x256xf32>
    %15 = arith.select %13, %11, %14 : vector<8x256xi1>, vector<8x256xf32>
    %cst_6 = arith.constant 0.000000e+00 : f32
    %16 = vector.broadcast %cst_6 : f32 to vector<8x256xf32>
    %17 = arith.maximumf %3, %16 : vector<8x256xf32>
    %18 = arith.mulf %3, %4 : vector<8x256xf32>
    %19 = arith.subf %17, %18 : vector<8x256xf32>
    %20 = math.log1p %8 : vector<8x256xf32>
    %21 = arith.addf %19, %20 : vector<8x256xf32>
    %22 = arith.mulf %15, %4 : vector<8x256xf32>
    %cst_7 = arith.constant dense<0.000000e+00> : vector<8xf32>
    %23 = vector.multi_reduction <add>, %22, %cst_7 [1] : vector<8x256xf32> to vector<8xf32>
    %24 = vector.shape_cast %23 : vector<8xf32> to vector<8x1xf32>
    %cst_8 = arith.constant dense<0.000000e+00> : vector<8xf32>
    %25 = vector.multi_reduction <add>, %15, %cst_8 [1] : vector<8x256xf32> to vector<8xf32>
    %26 = vector.shape_cast %25 : vector<8xf32> to vector<8x1xf32>
    %cst_9 = arith.constant dense<0.000000e+00> : vector<8xf32>
    %27 = vector.multi_reduction <add>, %4, %cst_9 [1] : vector<8x256xf32> to vector<8xf32>
    %28 = vector.shape_cast %27 : vector<8xf32> to vector<8x1xf32>
    %cst_10 = arith.constant dense<0.000000e+00> : vector<8xf32>
    %29 = vector.multi_reduction <add>, %21, %cst_10 [1] : vector<8x256xf32> to vector<8xf32>
    %30 = vector.shape_cast %29 : vector<8xf32> to vector<8x1xf32>
    %31 = tpu.iota {dimensions = array<i32: 1>} : vector<8x128xi32>
    %c0_i32_11 = arith.constant 0 : i32
    %32 = vector.broadcast %c0_i32_11 : i32 to vector<8x128xi32>
    %33 = arith.cmpi eq, %31, %32 : vector<8x128xi32>
    %c1_i32 = arith.constant 1 : i32
    %34 = vector.broadcast %c1_i32 : i32 to vector<8x128xi32>
    %35 = arith.cmpi eq, %31, %34 : vector<8x128xi32>
    %c2_i32 = arith.constant 2 : i32
    %36 = vector.broadcast %c2_i32 : i32 to vector<8x128xi32>
    %37 = arith.cmpi eq, %31, %36 : vector<8x128xi32>
    %c3_i32 = arith.constant 3 : i32
    %38 = vector.broadcast %c3_i32 : i32 to vector<8x128xi32>
    %39 = arith.cmpi eq, %31, %38 : vector<8x128xi32>
    %cst_12 = arith.constant 0.000000e+00 : f32
    %40 = vector.shape_cast %30 : vector<8x1xf32> to vector<8x1xf32>
    %41 = vector.broadcast %40 : vector<8x1xf32> to vector<8x128xf32>
    %42 = vector.broadcast %cst_12 : f32 to vector<8x128xf32>
    %43 = arith.select %39, %41, %42 : vector<8x128xi1>, vector<8x128xf32>
    %44 = vector.shape_cast %28 : vector<8x1xf32> to vector<8x1xf32>
    %45 = vector.broadcast %44 : vector<8x1xf32> to vector<8x128xf32>
    %46 = arith.select %37, %45, %43 : vector<8x128xi1>, vector<8x128xf32>
    %47 = vector.shape_cast %26 : vector<8x1xf32> to vector<8x1xf32>
    %48 = vector.broadcast %47 : vector<8x1xf32> to vector<8x128xf32>
    %49 = arith.select %35, %48, %46 : vector<8x128xi1>, vector<8x128xf32>
    %50 = vector.shape_cast %24 : vector<8x1xf32> to vector<8x1xf32>
    %51 = vector.broadcast %50 : vector<8x1xf32> to vector<8x128xf32>
    %52 = arith.select %33, %51, %49 : vector<8x128xi1>, vector<8x128xf32>
    %c0_13 = arith.constant 0 : index
    %c0_14 = arith.constant 0 : index
    %53 = vector.load %arg4[%c0_13, %c0_14] : memref<8x128xf32, #tpu.memory_space<vmem>>, vector<8x128xf32>
    %54 = arith.addf %53, %52 : vector<8x128xf32>
    %c0_15 = arith.constant 0 : index
    %c0_16 = arith.constant 0 : index
    %55 = vector.load %arg4[%c0_15, %c0_16] : memref<8x128xf32, #tpu.memory_space<vmem>>, vector<8x128xf32>
    tpu.vector_store %arg4[%c0_15, %c0_16], %54 {strides = array<i32>} : memref<8x128xf32, #tpu.memory_space<vmem>>, vector<8x128xf32>,
    return
  }
  func.func @transform_0(%arg0: i32, %arg1: i32) -> (i32, i32) {
    %c0_i32 = arith.constant 0 : i32
    return %arg0, %arg1 : i32, i32
  }
  func.func @transform_1(%arg0: i32, %arg1: i32) -> (i32, i32) {
    %c0_i32 = arith.constant 0 : i32
    return %arg0, %arg1 : i32, i32
  }
  func.func @transform_2(%arg0: i32, %arg1: i32) -> (i32, i32) {
    %c0_i32 = arith.constant 0 : i32
    %c0_i32_0 = arith.constant 0 : i32
    return %arg0, %c0_i32 : i32, i32
  }
}

</mosaic_0001>

<llo_original>
// kernel: dc_and_bce_loss.1
$region0: #{dc_and_bce_loss.1}
  #allocation0 [shape = 'u32[]', space=smem, size = 0x4, offset = 0x4, fixed_abs, tag = 'smem constant byte address 0x4 - core index']
  #allocation1 [shape = 'u32[72,128]{1,0:T(1,128)}', space=vmem, size = 0x9000, scoped, tag = 'internal scratch']
  %s0 = inlined_call_operand.vmem [shape: f32[8,256], index: 0, kind: input, shape index: {}]
  %s1 = inlined_call_operand.vmem [shape: f32[8,256], index: 1, kind: input, shape index: {}]
  %s2 = inlined_call_operand.vmem [shape: f32[8,128], index: 2, kind: output, shape index: {}]
  %s3 = sld [smem:[#allocation0]]
  $region22: #{dc_and_bce_loss.1} parent=0
    _
  %s5 = ssub.s32 1, %s3
  %s6 = scalar_select 0, %s5, %s3
  // Predicated region
  $region2: #{dc_and_bce_loss.1} parent=0 // pred_check
    _
  $region3: #{dc_and_bce_loss.1} parent=0 // pred_check_branch
    %8 = sbr.rel (0) target = $region5
  $region4: #{dc_and_bce_loss.1} parent=0 // pred_region
    _
  $region5: #{dc_and_bce_loss.1} parent=0 // pred_fallthru
    _
  // Predicated region
  $region6: #{dc_and_bce_loss.1} parent=0 // pred_check
    _
  $region7: #{dc_and_bce_loss.1} parent=0 // pred_check_branch
    %10 = sbr.rel (0) target = $region9
  $region8: #{dc_and_bce_loss.1} parent=0 // pred_region
    _
  $region9: #{dc_and_bce_loss.1} parent=0 // pred_fallthru
    _
  %p11 = scmp.eq.s32.totalorder 0, 0
  // Predicated region
  $region10: #{dc_and_bce_loss.1} parent=0 // pred_check
    %p12 = pneg %p11
  $region11: #{dc_and_bce_loss.1} parent=0 // pred_check_branch
    %14 = sbr.rel (%p12) target = $region13
  $region12: #{dc_and_bce_loss.1} parent=0 // pred_region
    %15 = vst [vmem:[%s2] sm:$0xff] 0.0
  $region13: #{dc_and_bce_loss.1} parent=0 // pred_fallthru
    _
  %v16 = vld [vmem:[%s0] sm:$0xff]
  %v17 = vld [vmem:[%s0 + $0x8] sm:$0xff]
  %v18 = vld [vmem:[%s1] sm:$0xff]
  %v19 = vld [vmem:[%s1 + $0x8] sm:$0xff]
  %v20 = vand.u32 2147483647, %v16
  %v21 = vand.u32 2147483647, %v17
  %v22 = vsub.f32 0.0, %v20
  %v23 = vsub.f32 0.0, %v21
  %v24 = vmul.f32 %v22, 1.442695
  %v25 = vpow.pop %v24
  %v26 = vmul.f32 %v23, 1.442695
  %v27 = vpow.pop %v26
  %v28 = vadd.f32 %v25, 1.0
  %v29 = vadd.f32 %v27, 1.0
  %v30 = vrcp.pop %v28
  %v31 = vmul.f32 %v28, %v30
  %v32 = vsub.f32 1.0, %v31
  %v33 = vmul.f32 %v30, %v32
  %v34 = vadd.f32 %v30, %v33
  %vm35 = vweird.f32 %v28
  %vm36 = vweird.f32 %v30
  %vm37 = vmor %vm35, %vm36
  %v38 = vsel %vm37, %v30, %v34
  %v39 = vand.u32 2147483647, %v28
  %vm40 = vcmp.eq.f32.partialorder %v39, 8.507059e+37
  %v41 = vand.u32 %v28, 2147483648
  %v42 = vor.u32 1.1754944e-38, %v41
  %v43 = vsel %vm40, %v42, %v38
  %v44 = vrcp.pop %v29
  %v45 = vmul.f32 %v29, %v44
  %v46 = vsub.f32 1.0, %v45
  %v47 = vmul.f32 %v44, %v46
  %v48 = vadd.f32 %v44, %v47
  %vm49 = vweird.f32 %v29
  %vm50 = vweird.f32 %v44
  %vm51 = vmor %vm49, %vm50
  %v52 = vsel %vm51, %v44, %v48
  %v53 = vand.u32 2147483647, %v29
  %vm54 = vcmp.eq.f32.partialorder %v53, 8.507059e+37
  %v55 = vand.u32 %v29, 2147483648
  %v56 = vor.u32 1.1754944e-38, %v55
  %v57 = vsel %vm54, %v56, %v52
  %vm58 = vcmp.ge.f32.partialorder %v16, 0.0
  %vm59 = vcmp.ge.f32.partialorder %v17, 0.0
  %v60 = vmul.f32 %v25, %v43
  %v61 = vmul.f32 %v27, %v57
  %v62 = vsel %vm58, %v43, %v60
  %v63 = vsel %vm59, %v57, %v61
  %v64 = vmax.f32 %v16, 0.0
  %v65 = vmax.f32 %v17, 0.0
  %v66 = vmul.f32 %v16, %v18
  %v67 = vmul.f32 %v17, %v19
  %v68 = vsub.f32 %v64, %v66
  %v69 = vsub.f32 %v65, %v67
  %v70 = vadd.f32 %v25, 1.0
  %v71 = vlog2.pop %v70
  %v72 = vmul.f32 %v71, 0.6931472
  %v73 = vmul.f32 -0.5, %v25
  %v74 = vadd.f32 %v73, 1.0
  %v75 = vmul.f32 %v74, %v25
  %v76 = vand.u32 2147483647, %v25
  %vm77 = vcmp.lt.f32.partialorder %v76, 0.0004427343
  %v78 = vsel %vm77, %v75, %v72
  %v79 = vadd.f32 %v27, 1.0
  %v80 = vlog2.pop %v79
  %v81 = vmul.f32 %v80, 0.6931472
  %v82 = vmul.f32 -0.5, %v27
  %v83 = vadd.f32 %v82, 1.0
  %v84 = vmul.f32 %v83, %v27
  %v85 = vand.u32 2147483647, %v27
  %vm86 = vcmp.lt.f32.partialorder %v85, 0.0004427343
  %v87 = vsel %vm86, %v84, %v81
  %v88 = vadd.f32 %v68, %v78
  %v89 = vadd.f32 %v69, %v87
  %v90 = vmul.f32 %v62, %v18
  %v91 = vmul.f32 %v63, %v19
  %v92 = vadd.f32 %v90, %v91
  %93 = vadd.xlane.f32.xlu0 %v92
  %v94 = vpop.xlane.xlu0 %93
  %v95 = vadd.f32 %v62, %v63
  %96 = vadd.xlane.f32.xlu0 %v95
  %v97 = vpop.xlane.xlu0 %96
  %v98 = vadd.f32 %v18, %v19
  %99 = vadd.xlane.f32.xlu0 %v98
  %v100 = vpop.xlane.xlu0 %99
  %v101 = vadd.f32 %v88, %v89
  %102 = vadd.xlane.f32.xlu0 %v101
  %v103 = vpop.xlane.xlu0 %102
  %v104 = vlaneseq
  %v105 = vand.u32 %v104, 127
  %vm106 = vcmp.eq.s32.totalorder %v105, 0
  %vm107 = vcmp.eq.s32.totalorder %v105, 1
  %vm108 = vcmp.eq.s32.totalorder %v105, 2
  %vm109 = vcmp.eq.s32.totalorder %v105, 3
  %v110 = vsel %vm109, %v103, 0.0
  %v111 = vsel %vm108, %v100, %v110
  %v112 = vsel %vm107, %v97, %v111
  %v113 = vsel %vm106, %v94, %v112
  %v114 = vld [vmem:[%s2] sm:$0xff]
  %v115 = vadd.f32 %v114, %v113
  %116 = vst [vmem:[%s2] sm:$0xff] %v115
  // Predicated region
  $region14: #{dc_and_bce_loss.1} parent=0 // pred_check
    _
  $region15: #{dc_and_bce_loss.1} parent=0 // pred_check_branch
    %118 = sbr.rel (0) target = $region17
  $region16: #{dc_and_bce_loss.1} parent=0 // pred_region
    _
  $region17: #{dc_and_bce_loss.1} parent=0 // pred_fallthru
    _
  // Predicated region
  $region18: #{dc_and_bce_loss.1} parent=0 // pred_check
    _
  $region19: #{dc_and_bce_loss.1} parent=0 // pred_check_branch
    %120 = sbr.rel (0) target = $region21
  $region20: #{dc_and_bce_loss.1} parent=0 // pred_region
    _
  $region21: #{dc_and_bce_loss.1} parent=0 // pred_fallthru
    _

</llo_original>
